<compile_context>
chip_gen: v5e
topology: v5e:2x2
jax: 0.10.0
libtpu: 0.0.40
codegen_flags: <defaults>
</compile_context>

<pallas_src>
import functools

import numpy as np
import jax
import jax.numpy as jnp
from jax.experimental import pallas as pl
from jax.experimental.pallas import tpu as pltpu


def _round_up(x, m):
    return ((x + m - 1) // m) * m


def _frame(audio, n_fft, hop):
    """(B, L) -> (B, T, n_fft) frames, torch.stft(center=True) layout, no gather."""
    pad = n_fft // 2
    x = jnp.pad(audio, ((0, 0), (pad, pad)), mode="reflect")
    B, P = x.shape
    T = 1 + (P - n_fft) // hop
    if n_fft % hop == 0:
        # Strided-reshape construction: frame t = concat of r adjacent hop-blocks.
        r = n_fft // hop
        need = (T - 1 + r) * hop
        if need > P:  # defensive; need <= P always holds
            x = jnp.pad(x, ((0, 0), (0, need - P)))
        blocks = x[:, :need].reshape(B, -1, hop)                       # (B, T+r-1, hop)
        frames = jnp.concatenate([blocks[:, j:j + T] for j in range(r)], axis=-1)
    else:
        # TODO(synk): gather fallback when hop does not divide n_fft (not the module default).
        idx = jnp.arange(T)[:, None] * hop + jnp.arange(n_fft)[None, :]
        frames = x[:, idx]
    return frames  # (B, T, n_fft)


@functools.lru_cache(maxsize=None)
def _windowed_dft_basis_np(n_fft, win_length, f_pad):
    """Window-folded one-sided real-DFT bases, lane-padded: (n_fft, 2*f_pad) f32."""
    n_freq = n_fft // 2 + 1
    n = np.arange(n_fft, dtype=np.float64)[:, None]
    k = np.arange(n_freq, dtype=np.float64)[None, :]
    ang = 2.0 * np.pi * n * k / n_fft

    # hann, periodic (torch.hann_window default), centered-padded to n_fft if shorter.
    i = np.arange(win_length, dtype=np.float64)
    w = 0.5 * (1.0 - np.cos(2.0 * np.pi * i / win_length))
    if win_length < n_fft:
        lp = (n_fft - win_length) // 2
        w = np.pad(w, (lp, n_fft - win_length - lp))

    cw = w[:, None] * np.cos(ang)          # (n_fft, n_freq)
    sw = w[:, None] * (-np.sin(ang))       # sign irrelevant under magnitude
    padc = f_pad - n_freq                  # zero columns -> re=im=0 -> mag contribution 0
    cw = np.pad(cw, ((0, 0), (0, padc)))
    sw = np.pad(sw, ((0, 0), (0, padc)))
    return np.concatenate([cw, sw], axis=1).astype(np.float32)   # (n_fft, 2*f_pad)


@functools.lru_cache(maxsize=None)
def _windowed_dft_basis_dev(n_fft, win_length, f_pad, use_bf16):
    b = _windowed_dft_basis_np(n_fft, win_length, f_pad)
    return jnp.asarray(b, jnp.bfloat16 if use_bf16 else jnp.float32)


def _sc_kernel(fr_ref, basis_ref, dsq_ref, tsq_ref):
    # fr_ref   : (1, 2, tT, n_fft)  stacked [input ; target] frames (window folded into basis)
    # basis_ref: (n_fft, 2*f_pad)   [w*cos | -w*sin], zero-padded frequency columns
    # dsq_ref / tsq_ref : (1, 1, 1, 1) partial squared Frobenius norms for this tile
    tT = fr_ref.shape[2]
    n_fft = fr_ref.shape[3]
    f_pad = basis_ref.shape[1] // 2

    # Leading-dim collapse (2, tT, n_fft) -> (2*tT, n_fft). tT % 8 == 0 so the last two
    # dims' tiling is unchanged: layout no-op (no concat/cast copy), ONE fused MXU matmul.
    x = fr_ref[0].reshape(2 * tT, n_fft)
    out = jnp.dot(x, basis_ref[...], preferred_element_type=jnp.float32)  # (2*tT, 2*f_pad)

    # 8/128-aligned static slices of the fused result.
    re_i = out[:tT, :f_pad]
    im_i = out[:tT, f_pad:]
    re_t = out[tT:, :f_pad]
    im_t = out[tT:, f_pad:]

    pow_i = re_i * re_i + im_i * im_i
    pow_t = re_t * re_t + im_t * im_t
    # (|S_i| - |S_t|)^2 = pow_i + pow_t - 2*sqrt(pow_i*pow_t): one EUP sqrt per element
    # instead of two; zero-padded frames / frequency columns contribute exactly 0.
    cross = jnp.sqrt(pow_i * pow_t)
    dsq_elem = pow_i + pow_t - 2.0 * cross

    dsq = jnp.sum(jnp.sum(dsq_elem, axis=1, keepdims=True), axis=0, keepdims=True)  # (1,1)
    tsq = jnp.sum(jnp.sum(pow_t, axis=1, keepdims=True), axis=0, keepdims=True)     # (1,1)
    dsq_ref[0, 0] = dsq
    tsq_ref[0, 0] = tsq


def spectral_convergence(input, target, *, n_fft=2048, win_length=None,
                         hop_length=1024, use_bf16=True):
    if win_length is None:
        win_length = n_fft
    compute_dtype = jnp.bfloat16 if use_bf16 else jnp.float32

    x = jnp.asarray(input["audio"], jnp.float32)
    y = jnp.asarray(target["audio"], jnp.float32)
    B = x.shape[0]

    fi = _frame(x, n_fft, hop_length)        # (B, T, n_fft)
    ft = _frame(y, n_fft, hop_length)
    T = fi.shape[1]

    n_freq = n_fft // 2 + 1
    f_pad = _round_up(n_freq, 128)           # lane-aligned DFT width
    basis = _windowed_dft_basis_dev(n_fft, win_length, f_pad, use_bf16)

    # Frame-tile size: make the fused matmul M-dim (= 2*tT) large (>=1024 at n_fft=2048)
    # to amortize MXU weight pushes, while the stacked frame block stays ~4 MiB
    # (double-buffered -> ~8 MiB; fits under the v7x 64 MiB VMEM with the bf16 basis
    # single-buffered). Tile count is snapped to the clip length to avoid padded tiles.
    T8 = _round_up(T, 8)
    row_bytes = 2 * n_fft * (2 if use_bf16 else 4)
    tT_max = max(8, min(1024, ((4 << 20) // row_bytes) // 8 * 8))
    n_tiles = -(-T8 // tT_max)
    if B == 1 and T8 >= 16:
        n_tiles = max(n_tiles, 2)            # keep >=2 grid steps: feeds both v7x TCs
    tT = _round_up(-(-T8 // n_tiles), 8)
    Tpad = n_tiles * tT
    nT = n_tiles

    if Tpad != T:
        # Zero frames -> zero magnitude -> contribute nothing to either norm.
        fi = jnp.pad(fi, ((0, 0), (0, Tpad - T), (0, 0)))
        ft = jnp.pad(ft, ((0, 0), (0, Tpad - T), (0, 0)))

    # Pre-stack input/target along a size-2 axis and cast to the MXU compute dtype on
    # the host: one input DMA stream, no in-kernel concat/cast copy.
    frames = jnp.stack([fi, ft], axis=1).astype(compute_dtype)   # (B, 2, Tpad, n_fft)

    dsq_p, tsq_p = pl.pallas_call(
        _sc_kernel,
        out_shape=(jax.ShapeDtypeStruct((B, nT, 1, 1), jnp.float32),
                   jax.ShapeDtypeStruct((B, nT, 1, 1), jnp.float32)),
        grid=(B, nT),
        in_specs=[
            pl.BlockSpec((1, 2, tT, n_fft), lambda b, t: (b, 0, t, 0)),
            # Resident constant: constant index_map, single-buffered (no wasted 2nd buffer).
            pl.BlockSpec((n_fft, 2 * f_pad), lambda b, t: (0, 0),
                         pipeline_mode=pl.Buffered(1)),
        ],
        out_specs=(
            pl.BlockSpec((1, 1, 1, 1), lambda b, t: (b, t, 0, 0)),
            pl.BlockSpec((1, 1, 1, 1), lambda b, t: (b, t, 0, 0)),
        ),
        compiler_params=pltpu.CompilerParams(
            dimension_semantics=("parallel", "parallel"),
            vmem_limit_bytes=56 * 1024 * 1024,   # safe under v7x's 64 MiB; ample on v5e/v6e
        ),
    )(frames, basis)

    # Tiny JAX glue: sum per-tile partials, per-batch Frobenius ratio, mean.
    dsq = jnp.sum(dsq_p[:, :, 0, 0], axis=1)     # (B,)
    tsq = jnp.sum(tsq_p[:, :, 0, 0], axis=1)     # (B,)
    # TODO(synk): add eps / custom_vjp before using under jax.grad (sqrt(0), 0/0 cases);
    # forward value matches the PyTorch module exactly without it.
    sc = jnp.sqrt(dsq) / jnp.sqrt(tsq)
    return jnp.mean(sc)


if __name__ == "__main__":
    key = jax.random.PRNGKey(0)
    k1, k2 = jax.random.split(key)
    B, L = 2, 1920                      # 16 frames of 256 samples, hop 128
    x = jax.random.normal(k1, (B, L), dtype=jnp.float32)
    y = jax.random.normal(k2, (B, L), dtype=jnp.float32)

    loss = spectral_convergence({"audio": x}, {"audio": y},
                                n_fft=256, win_length=None, hop_length=128)
    loss = jax.block_until_ready(loss)
    assert bool(jnp.isfinite(loss))
    print("KERNEL_OK")
</pallas_src>

<mosaic_0001>
module attributes {stable_mosaic.version = 11 : i64} {
  func.func @_sc_kernel(%arg0: i32, %arg1: i32, %arg2: memref<1x2x16x256xbf16, #tpu.memory_space<vmem>>, %arg3: memref<256x512xbf16, #tpu.memory_space<vmem>>, %arg4: memref<1x1x1x1xf32, #tpu.memory_space<vmem>>, %arg5: memref<1x1x1x1xf32, #tpu.memory_space<vmem>>) attributes {dimension_semantics = [#tpu.dimension_semantics<parallel>, #tpu.dimension_semantics<parallel>], iteration_bounds = array<i64: 2, 1>, scalar_prefetch = 0 : i64, scratch_operands = 0 : i64, tpu.core_type = #tpu.core_type<tc>, window_params = [{transform_indices = @transform_0, window_bounds = array<i64: 1, 2, 16, 256>}, {pipeline_mode = #tpu.pipeline_mode<synchronous>, transform_indices = @transform_1, window_bounds = array<i64: 256, 512>}, {transform_indices = @transform_2, window_bounds = array<i64: 1, 1, 1, 1>}, {transform_indices = @transform_3, window_bounds = array<i64: 1, 1, 1, 1>}]} {
    %c0 = arith.constant 0 : index
    %c0_0 = arith.constant 0 : index
    %c0_1 = arith.constant 0 : index
    %c0_2 = arith.constant 0 : index
    %0 = vector.load %arg2[%c0, %c0_0, %c0_1, %c0_2] : memref<1x2x16x256xbf16, #tpu.memory_space<vmem>>, vector<1x2x16x256xbf16>
    %1 = vector.shape_cast %0 : vector<1x2x16x256xbf16> to vector<2x16x256xbf16>
    %2 = vector.shape_cast %1 : vector<2x16x256xbf16> to vector<32x256xbf16>
    %c0_3 = arith.constant 0 : index
    %c0_4 = arith.constant 0 : index
    %3 = vector.load %arg3[%c0_3, %c0_4] : memref<256x512xbf16, #tpu.memory_space<vmem>>, vector<256x512xbf16>
    %cst = arith.constant dense<0.000000e+00> : vector<32x512xf32>
    %4 = tpu.matmul %2, %3, %cst {dimension_numbers = #tpu.dot_dimension_numbers<[1], [0], [0], [1], [0, 0, 1, 1], [], []>} : vector<32x256xbf16>, vector<256x512xbf16>, vector<32x512xf32> -> vector<32x512xf32>
    %5 = vector.extract_strided_slice %4 {offsets = [0, 0], sizes = [16, 256], strides = [1, 1]} : vector<32x512xf32> to vector<16x256xf32>
    %6 = vector.extract_strided_slice %4 {offsets = [0, 256], sizes = [16, 256], strides = [1, 1]} : vector<32x512xf32> to vector<16x256xf32>
    %7 = vector.extract_strided_slice %4 {offsets = [16, 0], sizes = [16, 256], strides = [1, 1]} : vector<32x512xf32> to vector<16x256xf32>
    %8 = vector.extract_strided_slice %4 {offsets = [16, 256], sizes = [16, 256], strides = [1, 1]} : vector<32x512xf32> to vector<16x256xf32>
    %9 = arith.mulf %5, %5 : vector<16x256xf32>
    %10 = arith.mulf %6, %6 : vector<16x256xf32>
    %11 = arith.addf %9, %10 : vector<16x256xf32>
    %12 = arith.mulf %7, %7 : vector<16x256xf32>
    %13 = arith.mulf %8, %8 : vector<16x256xf32>
    %14 = arith.addf %12, %13 : vector<16x256xf32>
    %15 = arith.mulf %11, %14 : vector<16x256xf32>
    %16 = math.sqrt %15 : vector<16x256xf32>
    %17 = arith.addf %11, %14 : vector<16x256xf32>
    %cst_5 = arith.constant 2.000000e+00 : f32
    %18 = vector.broadcast %cst_5 : f32 to vector<16x256xf32>
    %19 = arith.mulf %18, %16 : vector<16x256xf32>
    %20 = arith.subf %17, %19 : vector<16x256xf32>
    %cst_6 = arith.constant dense<0.000000e+00> : vector<16xf32>
    %21 = vector.multi_reduction <add>, %20, %cst_6 [1] : vector<16x256xf32> to vector<16xf32>
    %22 = vector.shape_cast %21 : vector<16xf32> to vector<16x1xf32>
    %cst_7 = arith.constant dense<0.000000e+00> : vector<1xf32>
    %23 = vector.multi_reduction <add>, %22, %cst_7 [0] : vector<16x1xf32> to vector<1xf32>
    %24 = vector.shape_cast %23 : vector<1xf32> to vector<1x1xf32>
    %cst_8 = arith.constant dense<0.000000e+00> : vector<16xf32>
    %25 = vector.multi_reduction <add>, %14, %cst_8 [1] : vector<16x256xf32> to vector<16xf32>
    %26 = vector.shape_cast %25 : vector<16xf32> to vector<16x1xf32>
    %cst_9 = arith.constant dense<0.000000e+00> : vector<1xf32>
    %27 = vector.multi_reduction <add>, %26, %cst_9 [0] : vector<16x1xf32> to vector<1xf32>
    %28 = vector.shape_cast %27 : vector<1xf32> to vector<1x1xf32>
    %c0_10 = arith.constant 0 : index
    %c0_11 = arith.constant 0 : index
    %c0_12 = arith.constant 0 : index
    %c0_13 = arith.constant 0 : index
    %29 = vector.load %arg4[%c0_10, %c0_11, %c0_12, %c0_13] : memref<1x1x1x1xf32, #tpu.memory_space<vmem>>, vector<1x1x1x1xf32>
    %30 = vector.shape_cast %29 : vector<1x1x1x1xf32> to vector<1x1xf32>
    %31 = vector.shape_cast %24 : vector<1x1xf32> to vector<1x1x1x1xf32>
    tpu.vector_store %arg4[%c0_10, %c0_11, %c0_12, %c0_13], %31 {strides = array<i32>} : memref<1x1x1x1xf32, #tpu.memory_space<vmem>>, vector<1x1x1x1xf32>,
    %c0_14 = arith.constant 0 : index
    %c0_15 = arith.constant 0 : index
    %c0_16 = arith.constant 0 : index
    %c0_17 = arith.constant 0 : index
    %32 = vector.load %arg5[%c0_14, %c0_15, %c0_16, %c0_17] : memref<1x1x1x1xf32, #tpu.memory_space<vmem>>, vector<1x1x1x1xf32>
    %33 = vector.shape_cast %32 : vector<1x1x1x1xf32> to vector<1x1xf32>
    %34 = vector.shape_cast %28 : vector<1x1xf32> to vector<1x1x1x1xf32>
    tpu.vector_store %arg5[%c0_14, %c0_15, %c0_16, %c0_17], %34 {strides = array<i32>} : memref<1x1x1x1xf32, #tpu.memory_space<vmem>>, vector<1x1x1x1xf32>,
    return
  }
  func.func @transform_0(%arg0: i32, %arg1: i32) -> (i32, i32, i32, i32) {
    %c0_i32 = arith.constant 0 : i32
    %c0_i32_0 = arith.constant 0 : i32
    %c0_i32_1 = arith.constant 0 : i32
    return %arg0, %c0_i32, %arg1, %c0_i32_0 : i32, i32, i32, i32
  }
  func.func @transform_1(%arg0: i32, %arg1: i32) -> (i32, i32) {
    %c0_i32 = arith.constant 0 : i32
    %c0_i32_0 = arith.constant 0 : i32
    %c0_i32_1 = arith.constant 0 : i32
    return %c0_i32, %c0_i32_0 : i32, i32
  }
  func.func @transform_2(%arg0: i32, %arg1: i32) -> (i32, i32, i32, i32) {
    %c0_i32 = arith.constant 0 : i32
    %c0_i32_0 = arith.constant 0 : i32
    %c0_i32_1 = arith.constant 0 : i32
    return %arg0, %arg1, %c0_i32, %c0_i32_0 : i32, i32, i32, i32
  }
  func.func @transform_3(%arg0: i32, %arg1: i32) -> (i32, i32, i32, i32) {
    %c0_i32 = arith.constant 0 : i32
    %c0_i32_0 = arith.constant 0 : i32
    %c0_i32_1 = arith.constant 0 : i32
    return %arg0, %arg1, %c0_i32, %c0_i32_0 : i32, i32, i32, i32
  }
}

</mosaic_0001>

<llo_original>
// kernel: tpu_custom_call.1
$region0: #{tpu_custom_call.1}
  #allocation0 [shape = 'u32[]', space=smem, size = 0x4, offset = 0x4, fixed_abs, tag = 'smem constant byte address 0x4 - core index']
  #allocation1 [shape = 'u32[72,128]{1,0:T(1,128)}', space=vmem, size = 0x9000, scoped, tag = 'internal scratch']
  %s0 = inlined_call_operand.hbm [shape: bf16[2,2,16,256], index: 0, kind: input, shape index: {}]
  %s1 = inlined_call_operand.hbm [shape: bf16[256,512], index: 1, kind: input, shape index: {}]
  %s2 = inlined_call_operand.vmem [shape: f32[2,1,1,1], index: 2, kind: output, shape index: {0}]
  %s3 = inlined_call_operand.vmem [shape: f32[2,1,1,1], index: 3, kind: output, shape index: {1}]
  %4 = xla_tuple %s2, %s3
  %s5 = sld [smem:[#allocation0]]
  $region57: #{tpu_custom_call.1} parent=0
    _
  %s7 = ssub.s32 1, %s5
  %s8 = scalar_select 0, %s7, %s5
  $region1: #{tpu_custom_call.1} parent=0
    #allocation2 [shape = 'u8[32768]{0}', space=vmem, size = 0x8000, scoped, tag = 'input window, operand 0']
    #allocation3 [shape = 's32[2]{0}', space=sflag, size = 0x8, scoped, tag = 'scoped memory for tpu_custom_call.1']
    #allocation4 [shape = 'u8[262144]{0}', space=vmem, size = 0x40000, scoped, tag = 'input window, operand 1, single buffered']
    #allocation5 [shape = 's32[1]{0}', space=sflag, size = 0x4, scoped, tag = 'scoped memory for tpu_custom_call.1']
    %9 = vsyncpa [#allocation3], 0
    %s10 = scalar_lea.sflag [#allocation3], 1
    %11 = vsyncpa %s10, 0
    %12 = vsyncpa [#allocation5], 0
    loop: start=0, step=1, limit=4
    $region2: #{tpu_custom_call.1} parent=1 // loop_pre_header
      _
    $region3: #{tpu_custom_call.1} parent=1 // loop_header
      %s14 = sphi 0, %s18
      %p15 = scmp.ge.s32.totalorder %s14, 4
      %s21 = sphi 0, %s33
      %s22 = sphi 0, %s29
      %s23 = sphi 0, %s21
      %s24 = sphi 0, %s22
      %s25 = sphi 0, %s23
      %s26 = sphi 0, %s24
      %s38 = sphi 0, %s40
      %s41 = sphi 0, %s38
      %s42 = sphi 0, %s41
      %s58 = sphi 0, %s42
      %s62 = sphi 0, %s62
      %s64 = sphi 0, %s62
      %s65 = sphi 0, %s64
      %s79 = sphi 0, %s65
      %s87 = sphi 0, %s89
      %s90 = sphi 0, %s87
      %s91 = sphi 0, %s90
      %s107 = sphi 0, %s91
      %s115 = sphi 0, %s117
      %s118 = sphi 0, %s115
      %s119 = sphi 0, %s118
      %s135 = sphi 0, %s119
    $region4: #{tpu_custom_call.1} parent=1 // loop_header_branch
      %17 = sbr.rel (%p15) target = $region8
    $region5: #{tpu_custom_call.1} parent=1 // loop_body
      %s19 = ssub.s32 %s14, 1
      %s20 = ssub.s32 %s14, 2
      %s27 = sadd.s32 1, %s22
      %p28 = scmp.ge.s32.totalorder %s27, 1
      %s29 = scalar_select %p28, 0, %s27
      %s30 = sadd.s32 1, %s21
      %s31 = scalar_select %p28, %s30, %s21
      %p32 = scmp.ge.s32.totalorder %s31, 2
      %s33 = scalar_select %p32, 0, %s31
      %s34 = ssub.s32 %s21, %s33
      %s35 = ssub.s32 %s22, %s29
      %s36 = sor.u32 %s34, %s35
      %p37 = scmp.eq.s32.totalorder %s36, 0
      %s39 = sadd.s32 %s38, 1
      %s40 = scalar_select %p37, %s38, %s39
      %p43 = pneg %p37
      %p44 = scmp.eq.s32.totalorder %s14, 1
      %p45 = por %p43, %p44
      %p46 = scmp.ne.s32.totalorder %s38, %s41
      %p47 = scmp.eq.s32.totalorder %s14, 0
      %p48 = por %p46, %p47
      %p49 = scmp.ne.s32.totalorder %s38, %s41
      %p50 = scmp.eq.s32.totalorder %s19, 1
      %p51 = por %p49, %p50
      %p52 = scmp.ne.s32.totalorder %s41, %s42
      %p53 = scmp.eq.s32.totalorder %s19, 0
      %p54 = por %p52, %p53
      %p55 = scmp.ne.s32.totalorder %s41, %s42
      %p56 = scmp.eq.s32.totalorder %s20, 1
      %p57 = por %p55, %p56
      %p59 = scmp.ne.s32.totalorder %s42, %s58
      %p60 = scmp.eq.s32.totalorder %s20, 0
      %p61 = por %p59, %p60
      %s63 = sadd.s32 %s62, 1
      %p66 = scmp.eq.s32.totalorder %s14, 1
      %p67 = scmp.ne.s32.totalorder %s62, %s64
      %p68 = scmp.eq.s32.totalorder %s14, 0
      %p69 = por %p67, %p68
      %p70 = scmp.ne.s32.totalorder %s62, %s64
      %p71 = scmp.eq.s32.totalorder %s19, 1
      %p72 = por %p70, %p71
      %p73 = scmp.ne.s32.totalorder %s64, %s65
      %p74 = scmp.eq.s32.totalorder %s19, 0
      %p75 = por %p73, %p74
      %p76 = scmp.ne.s32.totalorder %s64, %s65
      %p77 = scmp.eq.s32.totalorder %s20, 1
      %p78 = por %p76, %p77
      %p80 = scmp.ne.s32.totalorder %s65, %s79
      %p81 = scmp.eq.s32.totalorder %s20, 0
      %p82 = por %p80, %p81
      %s83 = ssub.s32 %s21, %s33
      %s84 = ssub.s32 %s22, %s29
      %s85 = sor.u32 %s83, %s84
      %p86 = scmp.eq.s32.totalorder %s85, 0
      %s88 = sadd.s32 %s87, 1
      %s89 = scalar_select %p86, %s87, %s88
      %p92 = pneg %p86
      %p93 = scmp.eq.s32.totalorder %s14, 1
      %p94 = por %p92, %p93
      %p95 = scmp.ne.s32.totalorder %s87, %s90
      %p96 = scmp.eq.s32.totalorder %s14, 0
      %p97 = por %p95, %p96
      %p98 = scmp.ne.s32.totalorder %s87, %s90
      %p99 = scmp.eq.s32.totalorder %s19, 1
      %p100 = por %p98, %p99
      %p101 = scmp.ne.s32.totalorder %s90, %s91
      %p102 = scmp.eq.s32.totalorder %s19, 0
      %p103 = por %p101, %p102
      %p104 = scmp.ne.s32.totalorder %s90, %s91
      %p105 = scmp.eq.s32.totalorder %s20, 1
      %p106 = por %p104, %p105
      %p108 = scmp.ne.s32.totalorder %s91, %s107
      %p109 = scmp.eq.s32.totalorder %s20, 0
      %p110 = por %p108, %p109
      %s111 = ssub.s32 %s21, %s33
      %s112 = ssub.s32 %s22, %s29
      %s113 = sor.u32 %s111, %s112
      %p114 = scmp.eq.s32.totalorder %s113, 0
      %s116 = sadd.s32 %s115, 1
      %s117 = scalar_select %p114, %s115, %s116
      %p120 = pneg %p114
      %p121 = scmp.eq.s32.totalorder %s14, 1
      %p122 = por %p120, %p121
      %p123 = scmp.ne.s32.totalorder %s115, %s118
      %p124 = scmp.eq.s32.totalorder %s14, 0
      %p125 = por %p123, %p124
      %p126 = scmp.ne.s32.totalorder %s115, %s118
      %p127 = scmp.eq.s32.totalorder %s19, 1
      %p128 = por %p126, %p127
      %p129 = scmp.ne.s32.totalorder %s118, %s119
      %p130 = scmp.eq.s32.totalorder %s19, 0
      %p131 = por %p129, %p130
      %p132 = scmp.ne.s32.totalorder %s118, %s119
      %p133 = scmp.eq.s32.totalorder %s20, 1
      %p134 = por %p132, %p133
      %p136 = scmp.ne.s32.totalorder %s119, %s135
      %p137 = scmp.eq.s32.totalorder %s20, 0
      %p138 = por %p136, %p137
      %p139 = scmp.le.s32.totalorder 1, %s14
      %p140 = scmp.lt.s32.totalorder %s14, 3
      %p141 = pnand %p139, %p140
      %p142 = pneg %p141
      // Predicated region
      $region9: #{tpu_custom_call.1} parent=5 // pred_check
        _
      $region10: #{tpu_custom_call.1} parent=5 // pred_check_branch
        %144 = sbr.rel (%p141) target = $region12
      $region11: #{tpu_custom_call.1} parent=5 // pred_region
        %s145 = ssub.s32 %s14, 1
        // Predicated region
        $region13: #{tpu_custom_call.1} parent=11 // pred_check
          %p146 = pneg %p75
        $region14: #{tpu_custom_call.1} parent=11 // pred_check_branch
          %148 = sbr.rel (%p146) target = $region16
        $region15: #{tpu_custom_call.1} parent=11 // pred_region
          %150 = vsyncadd [#allocation5], 0
          %s151 = sshll.u32 %s1, 4
          %s152 = int_to_ptr.hbm [resolvable:$true] %s151
          %s153 = sshll.u32 [#allocation4], 4
          %s154 = int_to_ptr.vmem [resolvable:$true] %s153
          %159 = dma.hbm_to_vmem [thread:$0]  %s152, 8192, %s154, [#allocation5], 256, 256, 16
        $region16: #{tpu_custom_call.1} parent=11 // pred_fallthru
          _
      $region12: #{tpu_custom_call.1} parent=5 // pred_fallthru
        _
      %p160 = scmp.lt.s32.totalorder %s14, 2
      // Predicated region
      $region17: #{tpu_custom_call.1} parent=5 // pred_check
        %p161 = pneg %p160
      $region18: #{tpu_custom_call.1} parent=5 // pred_check_branch
        %163 = sbr.rel (%p161) target = $region20
      $region19: #{tpu_custom_call.1} parent=5 // pred_region
        // Predicated region
        $region21: #{tpu_custom_call.1} parent=19 // pred_check
          %p164 = pneg %p48
        $region22: #{tpu_custom_call.1} parent=19 // pred_check_branch
          %166 = sbr.rel (%p164) target = $region24
        $region23: #{tpu_custom_call.1} parent=19 // pred_region
          %s167 = sand.u32 %s38, 1
          %s168 = scalar_lea.sflag [#allocation3], %s167
          %s169 = sand.u32 %s38, 1
          %s170 = smul.addr %s169, 32
          %s171 = scalar_lea.vmem [#allocation2], %s170
          %s172 = smul.u32 2, %s22
          %174 = vsyncadd %s168, 0
          %s175 = smul.addr %s172, 2
          %s176 = smul.addr %s21, 8
          %s177 = sadd.s32 %s175, %s176
          %s178 = smul.addr %s177, 4
          %s179 = scalar_lea.hbm %s0, %s178
          %s180 = sshll.u32 %s179, 4
          %s181 = int_to_ptr.hbm [resolvable:$true] %s180
          %s182 = sshll.u32 %s171, 4
          %s183 = int_to_ptr.vmem [resolvable:$true] %s182
          %188 = dma.hbm_to_vmem [thread:$0]  %s181, 512, %s183, %s168, 128, 128, 8
        $region24: #{tpu_custom_call.1} parent=19 // pred_fallthru
          _
      $region20: #{tpu_custom_call.1} parent=5 // pred_fallthru
        _
      %p189 = scmp.le.s32.totalorder 1, %s14
      %p190 = scmp.lt.s32.totalorder %s14, 3
      %p191 = pnand %p189, %p190
      %p192 = pneg %p191
      // Predicated region
      $region25: #{tpu_custom_call.1} parent=5 // pred_check
        _
      $region26: #{tpu_custom_call.1} parent=5 // pred_check_branch
        %194 = sbr.rel (%p191) target = $region28
      $region27: #{tpu_custom_call.1} parent=5 // pred_region
        %s195 = ssub.s32 %s14, 1
        %s196 = sand.u32 %s41, 1
        %s197 = scalar_lea.sflag [#allocation3], %s196
        %s198 = sand.u32 %s41, 1
        %s199 = smul.addr %s198, 32
        %s200 = scalar_lea.vmem [#allocation2], %s199
        // Predicated region
        $region29: #{tpu_custom_call.1} parent=27 // pred_check
          %p201 = pneg %p54
        $region30: #{tpu_custom_call.1} parent=27 // pred_check_branch
          %203 = sbr.rel (%p201) target = $region32
        $region31: #{tpu_custom_call.1} parent=27 // pred_region
          %205 = dma.done %s197, 512
        $region32: #{tpu_custom_call.1} parent=27 // pred_fallthru
          _
        // Predicated region
        $region33: #{tpu_custom_call.1} parent=27 // pred_check
          %p206 = pneg %p75
        $region34: #{tpu_custom_call.1} parent=27 // pred_check_branch
          %208 = sbr.rel (%p206) target = $region36
        $region35: #{tpu_custom_call.1} parent=27 // pred_region
          %210 = dma.done [#allocation5], 8192
        $region36: #{tpu_custom_call.1} parent=27 // pred_fallthru
          _
        %s211 = sand.u32 %s41, 1
        %s212 = scalar_lea.sflag [#allocation3], %s211
        %s213 = sand.u32 %s41, 1
        %s214 = smul.addr %s213, 32
        %s215 = scalar_lea.vmem [#allocation2], %s214
        %p216 = pneg %p54
        %p217 = pneg %p51
        %p218 = pneg %p75
        %p219 = pneg %p72
        %p220 = pneg %p103
        %p221 = pneg %p100
        %p222 = scmp.lt.s32.totalorder %s23, 1
        %s223 = scalar_select %p222, %s23, 1
        %p224 = scmp.lt.s32.totalorder %s24, 0
        %s225 = scalar_select %p224, %s24, 0
        %s226 = sadd.s32 %s225, %s223
        %s227 = scalar_lea.vmem %s2, %s226
        %p228 = pneg %p131
        %p229 = pneg %p128
        %p230 = scmp.lt.s32.totalorder %s23, 1
        %s231 = scalar_select %p230, %s23, 1
        %p232 = scmp.lt.s32.totalorder %s24, 0
        %s233 = scalar_select %p232, %s24, 0
        %s234 = sadd.s32 %s233, %s231
        %s235 = scalar_lea.vmem %s3, %s234
        %s236 = smul.u32 2, %s24
        %p237 = scmp.lt.s32.totalorder %s23, 1
        %s238 = scalar_select %p237, %s23, 1
        %p239 = scmp.lt.s32.totalorder %s24, 0
        %s240 = scalar_select %p239, %s24, 0
        %s241 = sadd.s32 %s240, %s238
        %s242 = scalar_lea.vmem %s2, %s241
        %p243 = scmp.lt.s32.totalorder %s23, 1
        %s244 = scalar_select %p243, %s23, 1
        %p245 = scmp.lt.s32.totalorder %s24, 0
        %s246 = scalar_select %p245, %s24, 0
        %s247 = sadd.s32 %s246, %s244
        %s248 = scalar_lea.vmem %s3, %s247
        %v249 = vld [vmem:[%s200] sm:$0xff]
        %v250 = vld [vmem:[%s200 + $0x8] sm:$0xff]
        %v251 = vld [vmem:[%s200 + $0x10] sm:$0xff]
        %v252 = vld [vmem:[%s200 + $0x18] sm:$0xff]
        %v253 = vld [vmem:[#allocation4] sm:$0xff]
        %v254 = vld [vmem:[#allocation4 + $0x8] sm:$0xff]
        %v255 = vld [vmem:[#allocation4 + $0x10] sm:$0xff]
        %v256 = vld [vmem:[#allocation4 + $0x18] sm:$0xff]
        %v257 = vld [vmem:[#allocation4 + $0x20] sm:$0xff]
        %v258 = vld [vmem:[#allocation4 + $0x28] sm:$0xff]
        %v259 = vld [vmem:[#allocation4 + $0x30] sm:$0xff]
        %v260 = vld [vmem:[#allocation4 + $0x38] sm:$0xff]
        %v261 = vld [vmem:[#allocation4 + $0x40] sm:$0xff]
        %v262 = vld [vmem:[#allocation4 + $0x48] sm:$0xff]
        %v263 = vld [vmem:[#allocation4 + $0x50] sm:$0xff]
        %v264 = vld [vmem:[#allocation4 + $0x58] sm:$0xff]
        %v265 = vld [vmem:[#allocation4 + $0x60] sm:$0xff]
        %v266 = vld [vmem:[#allocation4 + $0x68] sm:$0xff]
        %v267 = vld [vmem:[#allocation4 + $0x70] sm:$0xff]
        %v268 = vld [vmem:[#allocation4 + $0x78] sm:$0xff]
        %v269 = vld [vmem:[#allocation4 + $0x80] sm:$0xff]
        %v270 = vld [vmem:[#allocation4 + $0x88] sm:$0xff]
        %v271 = vld [vmem:[#allocation4 + $0x90] sm:$0xff]
        %v272 = vld [vmem:[#allocation4 + $0x98] sm:$0xff]
        %v273 = vld [vmem:[#allocation4 + $0xa0] sm:$0xff]
        %v274 = vld [vmem:[#allocation4 + $0xa8] sm:$0xff]
        %v275 = vld [vmem:[#allocation4 + $0xb0] sm:$0xff]
        %v276 = vld [vmem:[#allocation4 + $0xb8] sm:$0xff]
        %v277 = vld [vmem:[#allocation4 + $0xc0] sm:$0xff]
        %v278 = vld [vmem:[#allocation4 + $0xc8] sm:$0xff]
        %v279 = vld [vmem:[#allocation4 + $0xd0] sm:$0xff]
        %v280 = vld [vmem:[#allocation4 + $0xd8] sm:$0xff]
        %v281 = vld [vmem:[#allocation4 + $0xe0] sm:$0xff]
        %v282 = vld [vmem:[#allocation4 + $0xe8] sm:$0xff]
        %v283 = vld [vmem:[#allocation4 + $0xf0] sm:$0xff]
        %v284 = vld [vmem:[#allocation4 + $0xf8] sm:$0xff]
        %v285 = vld [vmem:[#allocation4 + $0x100] sm:$0xff]
        %v286 = vld [vmem:[#allocation4 + $0x108] sm:$0xff]
        %v287 = vld [vmem:[#allocation4 + $0x110] sm:$0xff]
        %v288 = vld [vmem:[#allocation4 + $0x118] sm:$0xff]
        %v289 = vld [vmem:[#allocation4 + $0x120] sm:$0xff]
        %v290 = vld [vmem:[#allocation4 + $0x128] sm:$0xff]
        %v291 = vld [vmem:[#allocation4 + $0x130] sm:$0xff]
        %v292 = vld [vmem:[#allocation4 + $0x138] sm:$0xff]
        %v293 = vld [vmem:[#allocation4 + $0x140] sm:$0xff]
        %v294 = vld [vmem:[#allocation4 + $0x148] sm:$0xff]
        %v295 = vld [vmem:[#allocation4 + $0x150] sm:$0xff]
        %v296 = vld [vmem:[#allocation4 + $0x158] sm:$0xff]
        %v297 = vld [vmem:[#allocation4 + $0x160] sm:$0xff]
        %v298 = vld [vmem:[#allocation4 + $0x168] sm:$0xff]
        %v299 = vld [vmem:[#allocation4 + $0x170] sm:$0xff]
        %v300 = vld [vmem:[#allocation4 + $0x178] sm:$0xff]
        %v301 = vld [vmem:[#allocation4 + $0x180] sm:$0xff]
        %v302 = vld [vmem:[#allocation4 + $0x188] sm:$0xff]
        %v303 = vld [vmem:[#allocation4 + $0x190] sm:$0xff]
        %v304 = vld [vmem:[#allocation4 + $0x198] sm:$0xff]
        %v305 = vld [vmem:[#allocation4 + $0x1a0] sm:$0xff]
        %v306 = vld [vmem:[#allocation4 + $0x1a8] sm:$0xff]
        %v307 = vld [vmem:[#allocation4 + $0x1b0] sm:$0xff]
        %v308 = vld [vmem:[#allocation4 + $0x1b8] sm:$0xff]
        %v309 = vld [vmem:[#allocation4 + $0x1c0] sm:$0xff]
        %v310 = vld [vmem:[#allocation4 + $0x1c8] sm:$0xff]
        %v311 = vld [vmem:[#allocation4 + $0x1d0] sm:$0xff]
        %v312 = vld [vmem:[#allocation4 + $0x1d8] sm:$0xff]
        %v313 = vld [vmem:[#allocation4 + $0x1e0] sm:$0xff]
        %v314 = vld [vmem:[#allocation4 + $0x1e8] sm:$0xff]
        %v315 = vld [vmem:[#allocation4 + $0x1f0] sm:$0xff]
        %v316 = vld [vmem:[#allocation4 + $0x1f8] sm:$0xff]
        %v321 = vunpack.c.l.b16 %v249
        %v322 = vunpack.c.h.b16 %v249
        %v323 = vunpack.c.l.b16 %v250
        %v324 = vunpack.c.h.b16 %v250
        %v325 = vunpack.c.l.b16 %v251
        %v326 = vunpack.c.h.b16 %v251
        %v327 = vunpack.c.l.b16 %v252
        %v328 = vunpack.c.h.b16 %v252
        %v329 = vpack.c.b16 %v323, %v321
        %v330 = vpack.c.b16 %v324, %v322
        %v331 = vpack.c.b16 %v327, %v325
        %v332 = vpack.c.b16 %v328, %v326
        %v401 = vunpack.c.l.b16 %v253
        %v402 = vunpack.c.h.b16 %v253
        %v403 = vunpack.c.l.b16 %v254
        %v404 = vunpack.c.h.b16 %v254
        %v405 = vunpack.c.l.b16 %v255
        %v406 = vunpack.c.h.b16 %v255
        %v407 = vunpack.c.l.b16 %v256
        %v408 = vunpack.c.h.b16 %v256
        %v409 = vunpack.c.l.b16 %v257
        %v410 = vunpack.c.h.b16 %v257
        %v411 = vunpack.c.l.b16 %v258
        %v412 = vunpack.c.h.b16 %v258
        %v413 = vunpack.c.l.b16 %v259
        %v414 = vunpack.c.h.b16 %v259
        %v415 = vunpack.c.l.b16 %v260
        %v416 = vunpack.c.h.b16 %v260
        %v417 = vunpack.c.l.b16 %v261
        %v418 = vunpack.c.h.b16 %v261
        %v419 = vunpack.c.l.b16 %v262
        %v420 = vunpack.c.h.b16 %v262
        %v421 = vunpack.c.l.b16 %v263
        %v422 = vunpack.c.h.b16 %v263
        %v423 = vunpack.c.l.b16 %v264
        %v424 = vunpack.c.h.b16 %v264
        %v425 = vunpack.c.l.b16 %v265
        %v426 = vunpack.c.h.b16 %v265
        %v427 = vunpack.c.l.b16 %v266
        %v428 = vunpack.c.h.b16 %v266
        %v429 = vunpack.c.l.b16 %v267
        %v430 = vunpack.c.h.b16 %v267
        %v431 = vunpack.c.l.b16 %v268
        %v432 = vunpack.c.h.b16 %v268
        %v433 = vunpack.c.l.b16 %v269
        %v434 = vunpack.c.h.b16 %v269
        %v435 = vunpack.c.l.b16 %v270
        %v436 = vunpack.c.h.b16 %v270
        %v437 = vunpack.c.l.b16 %v271
        %v438 = vunpack.c.h.b16 %v271
        %v439 = vunpack.c.l.b16 %v272
        %v440 = vunpack.c.h.b16 %v272
        %v441 = vunpack.c.l.b16 %v273
        %v442 = vunpack.c.h.b16 %v273
        %v443 = vunpack.c.l.b16 %v274
        %v444 = vunpack.c.h.b16 %v274
        %v445 = vunpack.c.l.b16 %v275
        %v446 = vunpack.c.h.b16 %v275
        %v447 = vunpack.c.l.b16 %v276
        %v448 = vunpack.c.h.b16 %v276
        %v449 = vunpack.c.l.b16 %v277
        %v450 = vunpack.c.h.b16 %v277
        %v451 = vunpack.c.l.b16 %v278
        %v452 = vunpack.c.h.b16 %v278
        %v453 = vunpack.c.l.b16 %v279
        %v454 = vunpack.c.h.b16 %v279
        %v455 = vunpack.c.l.b16 %v280
        %v456 = vunpack.c.h.b16 %v280
        %v457 = vunpack.c.l.b16 %v281
        %v458 = vunpack.c.h.b16 %v281
        %v459 = vunpack.c.l.b16 %v282
        %v460 = vunpack.c.h.b16 %v282
        %v461 = vunpack.c.l.b16 %v283
        %v462 = vunpack.c.h.b16 %v283
        %v463 = vunpack.c.l.b16 %v284
        %v464 = vunpack.c.h.b16 %v284
        %v465 = vunpack.c.l.b16 %v285
        %v466 = vunpack.c.h.b16 %v285
        %v467 = vunpack.c.l.b16 %v286
        %v468 = vunpack.c.h.b16 %v286
        %v469 = vunpack.c.l.b16 %v287
        %v470 = vunpack.c.h.b16 %v287
        %v471 = vunpack.c.l.b16 %v288
        %v472 = vunpack.c.h.b16 %v288
        %v473 = vunpack.c.l.b16 %v289
        %v474 = vunpack.c.h.b16 %v289
        %v475 = vunpack.c.l.b16 %v290
        %v476 = vunpack.c.h.b16 %v290
        %v477 = vunpack.c.l.b16 %v291
        %v478 = vunpack.c.h.b16 %v291
        %v479 = vunpack.c.l.b16 %v292
        %v480 = vunpack.c.h.b16 %v292
        %v481 = vunpack.c.l.b16 %v293
        %v482 = vunpack.c.h.b16 %v293
        %v483 = vunpack.c.l.b16 %v294
        %v484 = vunpack.c.h.b16 %v294
        %v485 = vunpack.c.l.b16 %v295
        %v486 = vunpack.c.h.b16 %v295
        %v487 = vunpack.c.l.b16 %v296
        %v488 = vunpack.c.h.b16 %v296
        %v489 = vunpack.c.l.b16 %v297
        %v490 = vunpack.c.h.b16 %v297
        %v491 = vunpack.c.l.b16 %v298
        %v492 = vunpack.c.h.b16 %v298
        %v493 = vunpack.c.l.b16 %v299
        %v494 = vunpack.c.h.b16 %v299
        %v495 = vunpack.c.l.b16 %v300
        %v496 = vunpack.c.h.b16 %v300
        %v497 = vunpack.c.l.b16 %v301
        %v498 = vunpack.c.h.b16 %v301
        %v499 = vunpack.c.l.b16 %v302
        %v500 = vunpack.c.h.b16 %v302
        %v501 = vunpack.c.l.b16 %v303
        %v502 = vunpack.c.h.b16 %v303
        %v503 = vunpack.c.l.b16 %v304
        %v504 = vunpack.c.h.b16 %v304
        %v505 = vunpack.c.l.b16 %v305
        %v506 = vunpack.c.h.b16 %v305
        %v507 = vunpack.c.l.b16 %v306
        %v508 = vunpack.c.h.b16 %v306
        %v509 = vunpack.c.l.b16 %v307
        %v510 = vunpack.c.h.b16 %v307
        %v511 = vunpack.c.l.b16 %v308
        %v512 = vunpack.c.h.b16 %v308
        %v513 = vunpack.c.l.b16 %v309
        %v514 = vunpack.c.h.b16 %v309
        %v515 = vunpack.c.l.b16 %v310
        %v516 = vunpack.c.h.b16 %v310
        %v517 = vunpack.c.l.b16 %v311
        %v518 = vunpack.c.h.b16 %v311
        %v519 = vunpack.c.l.b16 %v312
        %v520 = vunpack.c.h.b16 %v312
        %v521 = vunpack.c.l.b16 %v313
        %v522 = vunpack.c.h.b16 %v313
        %v523 = vunpack.c.l.b16 %v314
        %v524 = vunpack.c.h.b16 %v314
        %v525 = vunpack.c.l.b16 %v315
        %v526 = vunpack.c.h.b16 %v315
        %v527 = vunpack.c.l.b16 %v316
        %v528 = vunpack.c.h.b16 %v316
        %v529 = vpack.c.b16 %v405, %v401
        %v530 = vpack.c.b16 %v406, %v402
        %v531 = vpack.c.b16 %v407, %v403
        %v532 = vpack.c.b16 %v408, %v404
        %v533 = vpack.c.b16 %v413, %v409
        %v534 = vpack.c.b16 %v414, %v410
        %v535 = vpack.c.b16 %v415, %v411
        %v536 = vpack.c.b16 %v416, %v412
        %v537 = vpack.c.b16 %v421, %v417
        %v538 = vpack.c.b16 %v422, %v418
        %v539 = vpack.c.b16 %v423, %v419
        %v540 = vpack.c.b16 %v424, %v420
        %v541 = vpack.c.b16 %v429, %v425
        %v542 = vpack.c.b16 %v430, %v426
        %v543 = vpack.c.b16 %v431, %v427
        %v544 = vpack.c.b16 %v432, %v428
        %v545 = vpack.c.b16 %v437, %v433
        %v546 = vpack.c.b16 %v438, %v434
        %v547 = vpack.c.b16 %v439, %v435
        %v548 = vpack.c.b16 %v440, %v436
        %v549 = vpack.c.b16 %v445, %v441
        %v550 = vpack.c.b16 %v446, %v442
        %v551 = vpack.c.b16 %v447, %v443
        %v552 = vpack.c.b16 %v448, %v444
        %v553 = vpack.c.b16 %v453, %v449
        %v554 = vpack.c.b16 %v454, %v450
        %v555 = vpack.c.b16 %v455, %v451
        %v556 = vpack.c.b16 %v456, %v452
        %v557 = vpack.c.b16 %v461, %v457
        %v558 = vpack.c.b16 %v462, %v458
        %v559 = vpack.c.b16 %v463, %v459
        %v560 = vpack.c.b16 %v464, %v460
        %v561 = vpack.c.b16 %v469, %v465
        %v562 = vpack.c.b16 %v470, %v466
        %v563 = vpack.c.b16 %v471, %v467
        %v564 = vpack.c.b16 %v472, %v468
        %v565 = vpack.c.b16 %v477, %v473
        %v566 = vpack.c.b16 %v478, %v474
        %v567 = vpack.c.b16 %v479, %v475
        %v568 = vpack.c.b16 %v480, %v476
        %v569 = vpack.c.b16 %v485, %v481
        %v570 = vpack.c.b16 %v486, %v482
        %v571 = vpack.c.b16 %v487, %v483
        %v572 = vpack.c.b16 %v488, %v484
        %v573 = vpack.c.b16 %v493, %v489
        %v574 = vpack.c.b16 %v494, %v490
        %v575 = vpack.c.b16 %v495, %v491
        %v576 = vpack.c.b16 %v496, %v492
        %v577 = vpack.c.b16 %v501, %v497
        %v578 = vpack.c.b16 %v502, %v498
        %v579 = vpack.c.b16 %v503, %v499
        %v580 = vpack.c.b16 %v504, %v500
        %v581 = vpack.c.b16 %v509, %v505
        %v582 = vpack.c.b16 %v510, %v506
        %v583 = vpack.c.b16 %v511, %v507
        %v584 = vpack.c.b16 %v512, %v508
        %v585 = vpack.c.b16 %v517, %v513
        %v586 = vpack.c.b16 %v518, %v514
        %v587 = vpack.c.b16 %v519, %v515
        %v588 = vpack.c.b16 %v520, %v516
        %v589 = vpack.c.b16 %v525, %v521
        %v590 = vpack.c.b16 %v526, %v522
        %v591 = vpack.c.b16 %v527, %v523
        %v592 = vpack.c.b16 %v528, %v524
        %657 = vmatpush.bf16.msra.mxu0 %v557
        %658 = vmatpush.bf16.msra.mxu0 %v553
        %659 = vmatpush.bf16.msra.mxu0 %v549
        %660 = vmatpush.bf16.msra.mxu0 %v545
        %661 = vmatpush.bf16.msra.mxu0 %v541
        %662 = vmatpush.bf16.msra.mxu0 %v537
        %663 = vmatpush.bf16.msra.mxu0 %v533
        %664 = vmatpush.bf16.msra.mxu0 %v529
        %665 = vmatmul.bf16.gmra.mxu0 %v329
        %v666 = vpop.f32.mrf.mxu0
        %v667 = vadd.f32 0.0, %v666
        %v668 = vpop.f32.mrf.mxu0
        %v669 = vadd.f32 0.0, %v668
        %670 = vmatmul.bf16.gmra.mxu0 %v331
        %v671 = vpop.f32.mrf.mxu0
        %v672 = vadd.f32 0.0, %v671
        %v673 = vpop.f32.mrf.mxu0
        %v674 = vadd.f32 0.0, %v673
        %675 = vdwg.mxu0
        %676 = vmatpush.bf16.msra.mxu0 %v589
        %677 = vmatpush.bf16.msra.mxu0 %v585
        %678 = vmatpush.bf16.msra.mxu0 %v581
        %679 = vmatpush.bf16.msra.mxu0 %v577
        %680 = vmatpush.bf16.msra.mxu0 %v573
        %681 = vmatpush.bf16.msra.mxu0 %v569
        %682 = vmatpush.bf16.msra.mxu0 %v565
        %683 = vmatpush.bf16.msra.mxu0 %v561
        %684 = vmatmul.bf16.gmra.mxu0 %v330
        %v685 = vpop.f32.mrf.mxu0
        %v686 = vadd.f32 %v667, %v685
        %v687 = vpop.f32.mrf.mxu0
        %v688 = vadd.f32 %v669, %v687
        %689 = vmatmul.bf16.gmra.mxu0 %v332
        %v690 = vpop.f32.mrf.mxu0
        %v691 = vadd.f32 %v672, %v690
        %v692 = vpop.f32.mrf.mxu0
        %v693 = vadd.f32 %v674, %v692
        %694 = vdwg.mxu0
        %695 = vmatpush.bf16.msra.mxu0 %v558
        %696 = vmatpush.bf16.msra.mxu0 %v554
        %697 = vmatpush.bf16.msra.mxu0 %v550
        %698 = vmatpush.bf16.msra.mxu0 %v546
        %699 = vmatpush.bf16.msra.mxu0 %v542
        %700 = vmatpush.bf16.msra.mxu0 %v538
        %701 = vmatpush.bf16.msra.mxu0 %v534
        %702 = vmatpush.bf16.msra.mxu0 %v530
        %703 = vmatmul.bf16.gmra.mxu0 %v329
        %v704 = vpop.f32.mrf.mxu0
        %v705 = vadd.f32 0.0, %v704
        %v706 = vpop.f32.mrf.mxu0
        %v707 = vadd.f32 0.0, %v706
        %708 = vmatmul.bf16.gmra.mxu0 %v331
        %v709 = vpop.f32.mrf.mxu0
        %v710 = vadd.f32 0.0, %v709
        %v711 = vpop.f32.mrf.mxu0
        %v712 = vadd.f32 0.0, %v711
        %713 = vdwg.mxu0
        %714 = vmatpush.bf16.msra.mxu0 %v590
        %715 = vmatpush.bf16.msra.mxu0 %v586
        %716 = vmatpush.bf16.msra.mxu0 %v582
        %717 = vmatpush.bf16.msra.mxu0 %v578
        %718 = vmatpush.bf16.msra.mxu0 %v574
        %719 = vmatpush.bf16.msra.mxu0 %v570
        %720 = vmatpush.bf16.msra.mxu0 %v566
        %721 = vmatpush.bf16.msra.mxu0 %v562
        %722 = vmatmul.bf16.gmra.mxu0 %v330
        %v723 = vpop.f32.mrf.mxu0
        %v724 = vadd.f32 %v705, %v723
        %v725 = vpop.f32.mrf.mxu0
        %v726 = vadd.f32 %v707, %v725
        %727 = vmatmul.bf16.gmra.mxu0 %v332
        %v728 = vpop.f32.mrf.mxu0
        %v729 = vadd.f32 %v710, %v728
        %v730 = vpop.f32.mrf.mxu0
        %v731 = vadd.f32 %v712, %v730
        %732 = vdwg.mxu0
        %733 = vmatpush.bf16.msra.mxu0 %v559
        %734 = vmatpush.bf16.msra.mxu0 %v555
        %735 = vmatpush.bf16.msra.mxu0 %v551
        %736 = vmatpush.bf16.msra.mxu0 %v547
        %737 = vmatpush.bf16.msra.mxu0 %v543
        %738 = vmatpush.bf16.msra.mxu0 %v539
        %739 = vmatpush.bf16.msra.mxu0 %v535
        %740 = vmatpush.bf16.msra.mxu0 %v531
        %741 = vmatmul.bf16.gmra.mxu0 %v329
        %v742 = vpop.f32.mrf.mxu0
        %v743 = vadd.f32 0.0, %v742
        %v744 = vpop.f32.mrf.mxu0
        %v745 = vadd.f32 0.0, %v744
        %746 = vmatmul.bf16.gmra.mxu0 %v331
        %v747 = vpop.f32.mrf.mxu0
        %v748 = vadd.f32 0.0, %v747
        %v749 = vpop.f32.mrf.mxu0
        %v750 = vadd.f32 0.0, %v749
        %751 = vdwg.mxu0
        %752 = vmatpush.bf16.msra.mxu0 %v591
        %753 = vmatpush.bf16.msra.mxu0 %v587
        %754 = vmatpush.bf16.msra.mxu0 %v583
        %755 = vmatpush.bf16.msra.mxu0 %v579
        %756 = vmatpush.bf16.msra.mxu0 %v575
        %757 = vmatpush.bf16.msra.mxu0 %v571
        %758 = vmatpush.bf16.msra.mxu0 %v567
        %759 = vmatpush.bf16.msra.mxu0 %v563
        %760 = vmatmul.bf16.gmra.mxu0 %v330
        %v761 = vpop.f32.mrf.mxu0
        %v762 = vadd.f32 %v743, %v761
        %v763 = vpop.f32.mrf.mxu0
        %v764 = vadd.f32 %v745, %v763
        %765 = vmatmul.bf16.gmra.mxu0 %v332
        %v766 = vpop.f32.mrf.mxu0
        %v767 = vadd.f32 %v748, %v766
        %v768 = vpop.f32.mrf.mxu0
        %v769 = vadd.f32 %v750, %v768
        %770 = vdwg.mxu0
        %771 = vmatpush.bf16.msra.mxu0 %v560
        %772 = vmatpush.bf16.msra.mxu0 %v556
        %773 = vmatpush.bf16.msra.mxu0 %v552
        %774 = vmatpush.bf16.msra.mxu0 %v548
        %775 = vmatpush.bf16.msra.mxu0 %v544
        %776 = vmatpush.bf16.msra.mxu0 %v540
        %777 = vmatpush.bf16.msra.mxu0 %v536
        %778 = vmatpush.bf16.msra.mxu0 %v532
        %779 = vmatmul.bf16.gmra.mxu0 %v329
        %v780 = vpop.f32.mrf.mxu0
        %v781 = vadd.f32 0.0, %v780
        %v782 = vpop.f32.mrf.mxu0
        %v783 = vadd.f32 0.0, %v782
        %784 = vmatmul.bf16.gmra.mxu0 %v331
        %v785 = vpop.f32.mrf.mxu0
        %v786 = vadd.f32 0.0, %v785
        %v787 = vpop.f32.mrf.mxu0
        %v788 = vadd.f32 0.0, %v787
        %789 = vdwg.mxu0
        %790 = vmatpush.bf16.msra.mxu0 %v592
        %791 = vmatpush.bf16.msra.mxu0 %v588
        %792 = vmatpush.bf16.msra.mxu0 %v584
        %793 = vmatpush.bf16.msra.mxu0 %v580
        %794 = vmatpush.bf16.msra.mxu0 %v576
        %795 = vmatpush.bf16.msra.mxu0 %v572
        %796 = vmatpush.bf16.msra.mxu0 %v568
        %797 = vmatpush.bf16.msra.mxu0 %v564
        %798 = vmatmul.bf16.gmra.mxu0 %v330
        %v799 = vpop.f32.mrf.mxu0
        %v800 = vadd.f32 %v781, %v799
        %v801 = vpop.f32.mrf.mxu0
        %v802 = vadd.f32 %v783, %v801
        %803 = vmatmul.bf16.gmra.mxu0 %v332
        %v804 = vpop.f32.mrf.mxu0
        %v805 = vadd.f32 %v786, %v804
        %v806 = vpop.f32.mrf.mxu0
        %v807 = vadd.f32 %v788, %v806
        %808 = vdwg.mxu0
        %v809 = vmul.f32 %v686, %v686
        %v810 = vmul.f32 %v724, %v724
        %v811 = vmul.f32 %v688, %v688
        %v812 = vmul.f32 %v726, %v726
        %v813 = vmul.f32 %v762, %v762
        %v814 = vmul.f32 %v800, %v800
        %v815 = vmul.f32 %v764, %v764
        %v816 = vmul.f32 %v802, %v802
        %v817 = vadd.f32 %v809, %v813
        %v818 = vadd.f32 %v810, %v814
        %v819 = vadd.f32 %v811, %v815
        %v820 = vadd.f32 %v812, %v816
        %v821 = vmul.f32 %v691, %v691
        %v822 = vmul.f32 %v729, %v729
        %v823 = vmul.f32 %v693, %v693
        %v824 = vmul.f32 %v731, %v731
        %v825 = vmul.f32 %v767, %v767
        %v826 = vmul.f32 %v805, %v805
        %v827 = vmul.f32 %v769, %v769
        %v828 = vmul.f32 %v807, %v807
        %v829 = vadd.f32 %v821, %v825
        %v830 = vadd.f32 %v822, %v826
        %v831 = vadd.f32 %v823, %v827
        %v832 = vadd.f32 %v824, %v828
        %v833 = vmul.f32 %v817, %v829
        %v834 = vmul.f32 %v818, %v830
        %v835 = vmul.f32 %v819, %v831
        %v836 = vmul.f32 %v820, %v832
        %v837 = vrsqrt.pop %v833
        %v838 = vmul.f32 %v837, %v833
        %v839 = vmul.f32 %v838, %v837
        %v840 = vmul.f32 0.5, %v839
        %v841 = vsub.f32 1.5, %v840
        %v842 = vmul.f32 %v837, %v841
        %v843 = vmul.f32 %v833, %v842
        %vm844 = vcmp.eq.f32.partialorder %v833, inf
        %v845 = vsel %vm844, %v833, %v843
        %vm846 = vcmp.eq.f32.partialorder %v833, 0.0
        %v847 = vand.u32 %v833, 2147483648
        %v848 = vsel %vm846, %v847, %v845
        %v849 = vrsqrt.pop %v834
        %v850 = vmul.f32 %v849, %v834
        %v851 = vmul.f32 %v850, %v849
        %v852 = vmul.f32 0.5, %v851
        %v853 = vsub.f32 1.5, %v852
        %v854 = vmul.f32 %v849, %v853
        %v855 = vmul.f32 %v834, %v854
        %vm856 = vcmp.eq.f32.partialorder %v834, inf
        %v857 = vsel %vm856, %v834, %v855
        %vm858 = vcmp.eq.f32.partialorder %v834, 0.0
        %v859 = vand.u32 %v834, 2147483648
        %v860 = vsel %vm858, %v859, %v857
        %v861 = vrsqrt.pop %v835
        %v862 = vmul.f32 %v861, %v835
        %v863 = vmul.f32 %v862, %v861
        %v864 = vmul.f32 0.5, %v863
        %v865 = vsub.f32 1.5, %v864
        %v866 = vmul.f32 %v861, %v865
        %v867 = vmul.f32 %v835, %v866
        %vm868 = vcmp.eq.f32.partialorder %v835, inf
        %v869 = vsel %vm868, %v835, %v867
        %vm870 = vcmp.eq.f32.partialorder %v835, 0.0
        %v871 = vand.u32 %v835, 2147483648
        %v872 = vsel %vm870, %v871, %v869
        %v873 = vrsqrt.pop %v836
        %v874 = vmul.f32 %v873, %v836
        %v875 = vmul.f32 %v874, %v873
        %v876 = vmul.f32 0.5, %v875
        %v877 = vsub.f32 1.5, %v876
        %v878 = vmul.f32 %v873, %v877
        %v879 = vmul.f32 %v836, %v878
        %vm880 = vcmp.eq.f32.partialorder %v836, inf
        %v881 = vsel %vm880, %v836, %v879
        %vm882 = vcmp.eq.f32.partialorder %v836, 0.0
        %v883 = vand.u32 %v836, 2147483648
        %v884 = vsel %vm882, %v883, %v881
        %v885 = vadd.f32 %v817, %v829
        %v886 = vadd.f32 %v818, %v830
        %v887 = vadd.f32 %v819, %v831
        %v888 = vadd.f32 %v820, %v832
        %v889 = vmul.f32 %v848, 2.0
        %v890 = vmul.f32 %v860, 2.0
        %v891 = vmul.f32 %v872, 2.0
        %v892 = vmul.f32 %v884, 2.0
        %v893 = vsub.f32 %v885, %v889
        %v894 = vsub.f32 %v886, %v890
        %v895 = vsub.f32 %v887, %v891
        %v896 = vsub.f32 %v888, %v892
        %v897 = vadd.f32 %v893, %v894
        %898 = vadd.xlane.f32.xlu0 %v897
        %v899 = vpop.xlane.xlu0 %898
        %v900 = vadd.f32 %v895, %v896
        %901 = vadd.xlane.f32.xlu0 %v900
        %v902 = vpop.xlane.xlu0 %901
        %v903 = vadd.f32 %v899, %v902
        %v904 = vrot.slane %v903, 4
        %v905 = vadd.f32 %v903, %v904
        %v906 = vrot.slane %v905, 2
        %v907 = vadd.f32 %v905, %v906
        %v908 = vrot.slane %v907, 1
        %v909 = vadd.f32 %v907, %v908
        %v910 = vadd.f32 %v829, %v830
        %911 = vadd.xlane.f32.xlu0 %v910
        %v912 = vpop.xlane.xlu0 %911
        %v913 = vadd.f32 %v831, %v832
        %914 = vadd.xlane.f32.xlu0 %v913
        %v915 = vpop.xlane.xlu0 %914
        %v916 = vadd.f32 %v912, %v915
        %v917 = vrot.slane %v916, 4
        %v918 = vadd.f32 %v916, %v917
        %v919 = vrot.slane %v918, 2
        %v920 = vadd.f32 %v918, %v919
        %v921 = vrot.slane %v920, 1
        %v922 = vadd.f32 %v920, %v921
        %vm923 = vcmask 0
        %924 = vst.msk [vmem:[%s242] sm:$0x1] %vm923, %v909
        %925 = vst.msk [vmem:[%s248] sm:$0x1] %vm923, %v922
        %p926 = scmp.lt.s32.totalorder %s23, 1
        %s927 = scalar_select %p926, %s23, 1
        %p928 = scmp.lt.s32.totalorder %s24, 0
        %s929 = scalar_select %p928, %s24, 0
        %s930 = sadd.s32 %s929, %s927
        %s931 = scalar_lea.vmem %s2, %s930
        %p932 = scmp.lt.s32.totalorder %s23, 1
        %s933 = scalar_select %p932, %s23, 1
        %p934 = scmp.lt.s32.totalorder %s24, 0
        %s935 = scalar_select %p934, %s24, 0
        %s936 = sadd.s32 %s935, %s933
        %s937 = scalar_lea.vmem %s3, %s936
        // Predicated region
        $region37: #{tpu_custom_call.1} parent=27 // pred_check
          %p938 = pneg %p100
        $region38: #{tpu_custom_call.1} parent=27 // pred_check_branch
          %940 = sbr.rel (%p938) target = $region40
        $region39: #{tpu_custom_call.1} parent=27 // pred_region
          _
        $region40: #{tpu_custom_call.1} parent=27 // pred_fallthru
          _
        // Predicated region
        $region41: #{tpu_custom_call.1} parent=27 // pred_check
          %p941 = pneg %p128
        $region42: #{tpu_custom_call.1} parent=27 // pred_check_branch
          %943 = sbr.rel (%p941) target = $region44
        $region43: #{tpu_custom_call.1} parent=27 // pred_region
          _
        $region44: #{tpu_custom_call.1} parent=27 // pred_fallthru
          _
      $region28: #{tpu_custom_call.1} parent=5 // pred_fallthru
        _
      %p944 = scmp.le.s32.totalorder 2, %s14
      // Predicated region
      $region45: #{tpu_custom_call.1} parent=5 // pred_check
        %p945 = pneg %p944
      $region46: #{tpu_custom_call.1} parent=5 // pred_check_branch
        %947 = sbr.rel (%p945) target = $region48
      $region47: #{tpu_custom_call.1} parent=5 // pred_region
        %s948 = ssub.s32 %s14, 2
        // Predicated region
        $region49: #{tpu_custom_call.1} parent=47 // pred_check
          %p949 = pneg %p106
        $region50: #{tpu_custom_call.1} parent=47 // pred_check_branch
          %951 = sbr.rel (%p949) target = $region52
        $region51: #{tpu_custom_call.1} parent=47 // pred_region
          %p952 = scmp.lt.s32.totalorder %s25, 1
          %s953 = scalar_select %p952, %s25, 1
          %p954 = scmp.lt.s32.totalorder %s26, 0
          %s955 = scalar_select %p954, %s26, 0
          %s956 = sadd.s32 %s955, %s953
          %s957 = scalar_lea.vmem %s2, %s956
        $region52: #{tpu_custom_call.1} parent=47 // pred_fallthru
          _
        // Predicated region
        $region53: #{tpu_custom_call.1} parent=47 // pred_check
          %p958 = pneg %p134
        $region54: #{tpu_custom_call.1} parent=47 // pred_check_branch
          %960 = sbr.rel (%p958) target = $region56
        $region55: #{tpu_custom_call.1} parent=47 // pred_region
          %p961 = scmp.lt.s32.totalorder %s25, 1
          %s962 = scalar_select %p961, %s25, 1
          %p963 = scmp.lt.s32.totalorder %s26, 0
          %s964 = scalar_select %p963, %s26, 0
          %s965 = sadd.s32 %s964, %s962
          %s966 = scalar_lea.vmem %s3, %s965
        $region56: #{tpu_custom_call.1} parent=47 // pred_fallthru
          _
      $region48: #{tpu_custom_call.1} parent=5 // pred_fallthru
        _
    $region6: #{tpu_custom_call.1} parent=1 // loop_footer
      %s18 = sadd.s32 1, %s14
    $region7: #{tpu_custom_call.1} parent=1 // loop_footer_branch
      %13 = sbr.rel target = $region3
    $region8: #{tpu_custom_call.1} parent=1 // loop_exit
      _
    %967 = vsyncpa [#allocation3], 1
    %s968 = scalar_lea.sflag [#allocation3], 1
    %969 = vsyncpa %s968, 1
    %970 = vsyncpa [#allocation5], 1

</llo_original>
